<compile_context>
chip_gen: v7x
topology: tpu7x:2x2x1
jax: 0.10.0
libtpu: 0.0.40
codegen_flags: <defaults>
</compile_context>

<pallas_src>
import functools

import jax
import jax.numpy as jnp
from jax.experimental import pallas as pl
from jax.experimental.pallas import tpu as pltpu

BN_EPS = 1e-5
_LANE = 128
_SUBLANE = 8


def _round_up(v, m):
    return (v + m - 1) // m * m


def _vmem_capacity_bytes():
    try:
        return int(pltpu.get_tpu_info().vmem_capacity_bytes)
    except Exception:
        return 64 * 1024 * 1024  # conservative default (v7x per-core VMEM)


# ---------------------------------------------------------------------------
# Kernels
# ---------------------------------------------------------------------------
def _pool_linear_bn_kernel(x_ref, w_ref, b_ref, o_ref, acc_ref, *,
                           hw, t_hw, ragged_hw):
    # x_ref:   (tn, C, t_hw)  input tile (any float dtype; accumulated in f32)
    # w_ref:   (C, OUT) f32   folded weight: W^T * gamma/sqrt(var+eps) / (H*W)
    # b_ref:   (1, OUT) f32   folded bias
    # o_ref:   (tn, OUT) f32
    # acc_ref: (tn, C)  f32   pooled-sum accumulator (VMEM scratch)
    k = pl.program_id(1)

    @pl.when(k == 0)
    def _():
        acc_ref[...] = jnp.zeros_like(acc_ref)

    x = x_ref[...].astype(jnp.float32)
    if ragged_hw:
        # Mask out-of-range lanes of the (ragged) last H*W tile so garbage in
        # the padded tail cannot corrupt the spatial sum.
        lane = jax.lax.broadcasted_iota(jnp.int32, x.shape, x.ndim - 1)
        x = jnp.where(k * t_hw + lane < hw, x, 0.0)
    acc_ref[...] += jnp.sum(x, axis=-1)

    @pl.when(k == pl.num_programs(1) - 1)
    def _():
        y = jnp.dot(acc_ref[...], w_ref[...], preferred_element_type=jnp.float32)
        o_ref[...] = (y + b_ref[...]).astype(o_ref.dtype)


def _linear_bn_kernel(x_ref, w_ref, b_ref, o_ref):
    # Lane-dense single-step path for 2-D inputs / 1x1 spatial.
    y = jnp.dot(x_ref[...].astype(jnp.float32), w_ref[...],
                preferred_element_type=jnp.float32)
    o_ref[...] = (y + b_ref[...]).astype(o_ref.dtype)


# ---------------------------------------------------------------------------
# Host-side folding / tiling helpers
# ---------------------------------------------------------------------------
def _fold_params(w_t, b, gamma, beta, running_mean, running_var, hw):
    """Fold BN (eval, running stats), Linear bias and 1/(H*W) into (w, b)."""
    out_dim = w_t.shape[1]
    w_t = w_t.astype(jnp.float32)
    b = b.astype(jnp.float32)
    if gamma is None:                       # bn_neck=False
        scale = jnp.ones((out_dim,), jnp.float32)
        shift = jnp.zeros((out_dim,), jnp.float32)
    else:
        rm = (jnp.zeros((out_dim,), jnp.float32) if running_mean is None
              else running_mean.astype(jnp.float32))
        rv = (jnp.ones((out_dim,), jnp.float32) if running_var is None
              else running_var.astype(jnp.float32))
        scale = gamma.astype(jnp.float32) / jnp.sqrt(rv + jnp.float32(BN_EPS))
        shift = beta.astype(jnp.float32) - rm * scale
    w_eff = w_t * scale[None, :] / jnp.float32(hw)
    b_eff = (b * scale + shift).reshape(1, -1)
    return w_eff, b_eff


def _choose_tiles_3d(N, C, hw, itemsize, per_buf_budget):
    # Grow t_hw (innermost, contiguous) first; prefer the full extent so each
    # sample's (C, hw) slab is one contiguous DMA.
    if _SUBLANE * C * hw * itemsize <= per_buf_budget or hw <= _LANE:
        t_hw = hw
    else:
        t_hw = (per_buf_budget // (_SUBLANE * C * itemsize)) // _LANE * _LANE
        t_hw = max(_LANE, t_hw)
        if t_hw >= hw:
            t_hw = hw
    # Then grow tn under the same per-buffer budget.
    tn = (per_buf_budget // max(1, C * t_hw * itemsize)) // _SUBLANE * _SUBLANE
    tn = max(_SUBLANE, min(tn, _round_up(N, _SUBLANE)))
    # Keep >= 2 steps on the parallel N axis when possible (v7x has 2 TCs).
    if N > _SUBLANE:
        tn = min(tn, _round_up((N + 1) // 2, _SUBLANE))
    return tn, t_hw


def _vmem_bytes_3d(tn, C, t_hw, out_dim, itemsize):
    sub_x = _SUBLANE * max(1, 4 // itemsize)          # sublane packing of x dtype
    x_buf = tn * _round_up(C, sub_x) * _round_up(t_hw, _LANE) * itemsize
    w_buf = _round_up(C, _SUBLANE) * _round_up(out_dim, _LANE) * 4
    b_buf = _SUBLANE * _round_up(out_dim, _LANE) * 4
    o_buf = _round_up(tn, _SUBLANE) * _round_up(out_dim, _LANE) * 4
    acc_buf = _round_up(tn, _SUBLANE) * _round_up(C, _LANE) * 4
    return 2 * (x_buf + w_buf + b_buf + o_buf) + acc_buf


# ---------------------------------------------------------------------------
# Public entry point
# ---------------------------------------------------------------------------
def bbox_regressor(x, w_t, b, gamma=None, beta=None,
                   running_mean=None, running_var=None, *,
                   tn=None, t_hw=None, per_buf_bytes=None):
    """BBoxRegressor forward (eval-mode BatchNorm1d).

    x:    (N, C, H, W) or (N, C)
    w_t:  (C, OUT) transposed PyTorch Linear weight
    b:    (OUT,)   Linear bias
    gamma/beta: BatchNorm1d affine params (None => bn_neck=False)
    running_mean/running_var: BN running stats (None => freshly initialised 0/1)
    """
    if x.ndim == 4:
        N, C, H, W = x.shape
        hw = H * W
        if hw == 1:
            x2, x3 = x.reshape(N, C), None
            hw = 1
        else:
            x2, x3 = None, x.reshape(N, C, hw)   # free view: contiguous merge
    elif x.ndim == 2:
        N, C = x.shape
        hw = 1
        x2, x3 = x, None
    else:
        raise ValueError(f"expected 2-D or 4-D input, got ndim={x.ndim}")

    out_dim = w_t.shape[1]
    w_eff, b_eff = _fold_params(w_t, b, gamma, beta, running_mean, running_var, hw)

    itemsize = jnp.dtype(x.dtype).itemsize
    vmem_cap = _vmem_capacity_bytes()
    per_buf_budget = per_buf_bytes or max(
        1 << 20, min(8 << 20, int(vmem_cap * 0.4) // 2))

    # ---------------- streamed pooled path (spatial reduction) -------------
    if x3 is not None:
        auto_tn, auto_thw = _choose_tiles_3d(N, C, hw, itemsize, per_buf_budget)
        if t_hw is None:
            t_hw_eff = auto_thw
        else:
            t_hw_eff = hw if int(t_hw) >= hw else max(
                _LANE, _round_up(int(t_hw), _LANE))
        tn_eff = auto_tn if tn is None else max(_SUBLANE,
                                                _round_up(int(tn), _SUBLANE))

        # Shrink tn if the working set would not fit physical VMEM.
        need = _vmem_bytes_3d(tn_eff, C, t_hw_eff, out_dim, itemsize)
        while tn_eff > _SUBLANE and need > int(0.85 * vmem_cap):
            tn_eff = max(_SUBLANE, _round_up(tn_eff // 2, _SUBLANE))
            need = _vmem_bytes_3d(tn_eff, C, t_hw_eff, out_dim, itemsize)

        n_i = -(-N // tn_eff)
        n_k = -(-hw // t_hw_eff)
        ragged_hw = (hw % t_hw_eff) != 0
        vmem_limit = int(min(max(need + (4 << 20), 16 << 20),
                             int(0.9 * vmem_cap)))

        kernel = functools.partial(_pool_linear_bn_kernel,
                                   hw=hw, t_hw=t_hw_eff, ragged_hw=ragged_hw)
        return pl.pallas_call(
            kernel,
            out_shape=jax.ShapeDtypeStruct((N, out_dim), jnp.float32),
            grid_spec=pltpu.PrefetchScalarGridSpec(
                num_scalar_prefetch=0,
                grid=(n_i, n_k),                        # reduction axis last
                in_specs=[
                    pl.BlockSpec((tn_eff, C, t_hw_eff), lambda i, k: (i, 0, k)),
                    pl.BlockSpec((C, out_dim), lambda i, k: (0, 0)),
                    pl.BlockSpec((1, out_dim), lambda i, k: (0, 0)),
                ],
                out_specs=pl.BlockSpec((tn_eff, out_dim), lambda i, k: (i, 0)),
                scratch_shapes=[pltpu.VMEM((tn_eff, C), jnp.float32)],
            ),
            compiler_params=pltpu.CompilerParams(
                dimension_semantics=("parallel", "arbitrary"),
                vmem_limit_bytes=vmem_limit),
        )(x3, w_eff, b_eff)

    # ---------------- lane-dense single-step path (2-D / 1x1 spatial) ------
    if tn is None:
        tn_eff = (per_buf_budget // max(1, C * itemsize)) // _SUBLANE * _SUBLANE
    else:
        tn_eff = int(tn)
    tn_eff = max(_SUBLANE, min(_round_up(tn_eff, _SUBLANE),
                               _round_up(N, _SUBLANE)))
    if N > _SUBLANE:
        tn_eff = min(tn_eff, _round_up((N + 1) // 2, _SUBLANE))

    sub_x = _SUBLANE * max(1, 4 // itemsize)
    x_buf = _round_up(tn_eff, sub_x) * _round_up(C, _LANE) * itemsize
    w_buf = _round_up(C, _SUBLANE) * _round_up(out_dim, _LANE) * 4
    o_buf = _round_up(tn_eff, _SUBLANE) * _round_up(out_dim, _LANE) * 4
    need = 2 * (x_buf + w_buf + o_buf) + (1 << 20)
    vmem_limit = int(min(max(need + (4 << 20), 16 << 20), int(0.9 * vmem_cap)))

    n_i = -(-N // tn_eff)
    return pl.pallas_call(
        _linear_bn_kernel,
        out_shape=jax.ShapeDtypeStruct((N, out_dim), jnp.float32),
        grid_spec=pltpu.PrefetchScalarGridSpec(
            num_scalar_prefetch=0,
            grid=(n_i,),
            in_specs=[
                pl.BlockSpec((tn_eff, C), lambda i: (i, 0)),
                pl.BlockSpec((C, out_dim), lambda i: (0, 0)),
                pl.BlockSpec((1, out_dim), lambda i: (0, 0)),
            ],
            out_specs=pl.BlockSpec((tn_eff, out_dim), lambda i: (i, 0)),
        ),
        compiler_params=pltpu.CompilerParams(
            dimension_semantics=("parallel",),
            vmem_limit_bytes=vmem_limit),
    )(x2, w_eff, b_eff)


# ---------------------------------------------------------------------------
# Pure-JAX reference (same eval-mode BN semantics)
# ---------------------------------------------------------------------------
def _reference(x, w_t, b, gamma=None, beta=None, running_mean=None,
               running_var=None):
    if x.ndim == 4 and x.shape[2:] != (1, 1):
        x = jnp.mean(x, axis=(2, 3))
    x = x.reshape(x.shape[0], -1).astype(jnp.float32)
    y = x @ w_t.astype(jnp.float32) + b.astype(jnp.float32)
    if gamma is not None:
        rm = 0.0 if running_mean is None else running_mean
        rv = 1.0 if running_var is None else running_var
        y = (y - rm) / jnp.sqrt(rv + BN_EPS) * gamma + beta
    return y


if __name__ == "__main__":
    key = jax.random.PRNGKey(0)
    keys = jax.random.split(key, 8)

    # --- Test 1: module-faithful config (in_channels=4, num_classes=2) ------
    N, C, H, W = 2, 4, 16, 16
    OUT = 4 * 2
    x = jax.random.normal(keys[0], (N, C, H, W), dtype=jnp.float32)
    # PyTorch __init__: Linear.weight ~ N(0,0.01), Linear.bias = 0,
    #                   BN.weight ~ N(0,0.01), BN.bias = 0, stats = (0, 1).
    lin_w = 0.01 * jax.random.normal(keys[1], (OUT, C), dtype=jnp.float32)
    lin_b = jnp.zeros((OUT,), jnp.float32)
    bn_w = 0.01 * jax.random.normal(keys[2], (OUT,), jnp.float32)
    bn_b = jnp.zeros((OUT,), jnp.float32)

    out = jax.block_until_ready(bbox_regressor(x, lin_w.T, lin_b, bn_w, bn_b))
    ref = _reference(x, lin_w.T, lin_b, bn_w, bn_b)
    assert out.shape == (N, OUT)
    assert jnp.allclose(out, ref, rtol=1e-4, atol=1e-7), "test1 mismatch"

    # --- Test 2: ragged N + ragged H*W, forced multi-step reduction ---------
    N2, C2, H2, W2 = 10, 4, 13, 13          # hw = 169 -> 2 k-steps at t_hw=128
    x2 = jax.random.normal(keys[3], (N2, C2, H2, W2), dtype=jnp.float32)
    w2 = jax.random.normal(keys[4], (OUT, C2), dtype=jnp.float32)
    b2 = jax.random.normal(keys[5], (OUT,), dtype=jnp.float32)
    g2 = 1.0 + 0.1 * jax.random.normal(keys[6], (OUT,), jnp.float32)
    be2 = 0.1 * jax.random.normal(keys[7], (OUT,), jnp.float32)
    rm2 = 0.05 * jnp.arange(OUT, dtype=jnp.float32)
    rv2 = 0.5 + 0.05 * jnp.arange(OUT, dtype=jnp.float32)

    out2 = jax.block_until_ready(
        bbox_regressor(x2, w2.T, b2, g2, be2, rm2, rv2, tn=8, t_hw=128))
    ref2 = _reference(x2, w2.T, b2, g2, be2, rm2, rv2)
    assert out2.shape == (N2, OUT)
    assert jnp.allclose(out2, ref2, rtol=1e-4, atol=1e-5), "test2 mismatch"

    # --- Test 3: 2-D input (already pooled/flattened features) --------------
    x3 = jax.random.normal(keys[3], (6, C2), dtype=jnp.float32)
    out3 = jax.block_until_ready(
        bbox_regressor(x3, w2.T, b2, g2, be2, rm2, rv2))
    ref3 = _reference(x3, w2.T, b2, g2, be2, rm2, rv2)
    assert jnp.allclose(out3, ref3, rtol=1e-4, atol=1e-5), "test3 mismatch"

    # TODO(synk): BatchNorm1d training-mode (batch statistics) is not
    # implemented; the kernel realises the eval-mode running-stats forward.
    print("KERNEL_OK")
</pallas_src>

<mosaic_0001>
module attributes {stable_mosaic.version = 11 : i64} {
  func.func @_pool_linear_bn_kernel(%arg0: i32, %arg1: i32, %arg2: memref<8x4x256xf32, #tpu.memory_space<vmem>>, %arg3: memref<4x8xf32, #tpu.memory_space<vmem>>, %arg4: memref<1x8xf32, #tpu.memory_space<vmem>>, %arg5: memref<8x8xf32, #tpu.memory_space<vmem>>, %arg6: memref<8x4xf32, #tpu.memory_space<vmem>>) attributes {dimension_semantics = [#tpu.dimension_semantics<parallel>, #tpu.dimension_semantics<arbitrary>], iteration_bounds = array<i64: 1, 1>, scalar_prefetch = 0 : i64, scratch_operands = 1 : i64, tpu.core_type = #tpu.core_type<tc>, window_params = [{transform_indices = @transform_0, window_bounds = array<i64: 8, 4, 256>}, {pipeline_mode = #tpu.pipeline_mode<synchronous>, transform_indices = @transform_1, window_bounds = array<i64: 4, 8>}, {pipeline_mode = #tpu.pipeline_mode<synchronous>, transform_indices = @transform_2, window_bounds = array<i64: 1, 8>}, {transform_indices = @transform_3, window_bounds = array<i64: 8, 8>}]} {
    %c0_i32 = arith.constant 0 : i32
    %0 = arith.cmpi eq, %arg1, %c0_i32 : i32
    %1 = arith.extui %0 : i1 to i32
    %c0_i32_0 = arith.constant 0 : i32
    %2 = arith.cmpi ne, %1, %c0_i32_0 : i32
    scf.if %2 {
      %cst_9 = arith.constant 0.000000e+00 : f32
      %11 = vector.broadcast %cst_9 : f32 to vector<8x4xf32>
      %c0_10 = arith.constant 0 : index
      %c0_11 = arith.constant 0 : index
      %12 = vector.load %arg6[%c0_10, %c0_11] : memref<8x4xf32, #tpu.memory_space<vmem>>, vector<8x4xf32>
      tpu.vector_store %arg6[%c0_10, %c0_11], %11 {strides = array<i32>} : memref<8x4xf32, #tpu.memory_space<vmem>>, vector<8x4xf32>,
    } else {
    }
    %c0 = arith.constant 0 : index
    %c0_1 = arith.constant 0 : index
    %c0_2 = arith.constant 0 : index
    %3 = vector.load %arg2[%c0, %c0_1, %c0_2] : memref<8x4x256xf32, #tpu.memory_space<vmem>>, vector<8x4x256xf32>
    %c0_3 = arith.constant 0 : index
    %c0_4 = arith.constant 0 : index
    %4 = vector.load %arg6[%c0_3, %c0_4] : memref<8x4xf32, #tpu.memory_space<vmem>>, vector<8x4xf32>
    %cst = arith.constant dense<0.000000e+00> : vector<8x4xf32>
    %5 = vector.multi_reduction <add>, %3, %cst [2] : vector<8x4x256xf32> to vector<8x4xf32>
    %6 = arith.addf %4, %5 : vector<8x4xf32>
    %c0_5 = arith.constant 0 : index
    %c0_6 = arith.constant 0 : index
    %7 = vector.load %arg6[%c0_5, %c0_6] : memref<8x4xf32, #tpu.memory_space<vmem>>, vector<8x4xf32>
    tpu.vector_store %arg6[%c0_5, %c0_6], %6 {strides = array<i32>} : memref<8x4xf32, #tpu.memory_space<vmem>>, vector<8x4xf32>,
    %c0_i32_7 = arith.constant 0 : i32
    %8 = arith.cmpi eq, %arg1, %c0_i32_7 : i32
    %9 = arith.extui %8 : i1 to i32
    %c0_i32_8 = arith.constant 0 : i32
    %10 = arith.cmpi ne, %9, %c0_i32_8 : i32
    scf.if %10 {
      %c0_9 = arith.constant 0 : index
      %c0_10 = arith.constant 0 : index
      %11 = vector.load %arg6[%c0_9, %c0_10] : memref<8x4xf32, #tpu.memory_space<vmem>>, vector<8x4xf32>
      %c0_11 = arith.constant 0 : index
      %c0_12 = arith.constant 0 : index
      %12 = vector.load %arg3[%c0_11, %c0_12] : memref<4x8xf32, #tpu.memory_space<vmem>>, vector<4x8xf32>
      %cst_13 = arith.constant dense<0.000000e+00> : vector<8x8xf32>
      %13 = tpu.matmul %11, %12, %cst_13 {dimension_numbers = #tpu.dot_dimension_numbers<[1], [0], [0], [1], [0, 0, 1, 1], [], []>} : vector<8x4xf32>, vector<4x8xf32>, vector<8x8xf32> -> vector<8x8xf32>
      %c0_14 = arith.constant 0 : index
      %c0_15 = arith.constant 0 : index
      %14 = vector.load %arg4[%c0_14, %c0_15] : memref<1x8xf32, #tpu.memory_space<vmem>>, vector<1x8xf32>
      %15 = vector.broadcast %14 : vector<1x8xf32> to vector<8x8xf32>
      %16 = arith.addf %13, %15 : vector<8x8xf32>
      %c0_16 = arith.constant 0 : index
      %c0_17 = arith.constant 0 : index
      %17 = vector.load %arg5[%c0_16, %c0_17] : memref<8x8xf32, #tpu.memory_space<vmem>>, vector<8x8xf32>
      tpu.vector_store %arg5[%c0_16, %c0_17], %16 {strides = array<i32>} : memref<8x8xf32, #tpu.memory_space<vmem>>, vector<8x8xf32>,
    } else {
    }
    return
  }
  func.func @transform_0(%arg0: i32, %arg1: i32) -> (i32, i32, i32) {
    %c0_i32 = arith.constant 0 : i32
    %c0_i32_0 = arith.constant 0 : i32
    return %arg0, %c0_i32, %arg1 : i32, i32, i32
  }
  func.func @transform_1(%arg0: i32, %arg1: i32) -> (i32, i32) {
    %c0_i32 = arith.constant 0 : i32
    %c0_i32_0 = arith.constant 0 : i32
    %c0_i32_1 = arith.constant 0 : i32
    return %c0_i32, %c0_i32_0 : i32, i32
  }
  func.func @transform_2(%arg0: i32, %arg1: i32) -> (i32, i32) {
    %c0_i32 = arith.constant 0 : i32
    %c0_i32_0 = arith.constant 0 : i32
    %c0_i32_1 = arith.constant 0 : i32
    return %c0_i32, %c0_i32_0 : i32, i32
  }
  func.func @transform_3(%arg0: i32, %arg1: i32) -> (i32, i32) {
    %c0_i32 = arith.constant 0 : i32
    %c0_i32_0 = arith.constant 0 : i32
    return %arg0, %c0_i32 : i32, i32
  }
}

</mosaic_0001>

<llo_original>
// kernel: tpu_custom_call.1
$region0: #{tpu_custom_call.1}
  #allocation0 [shape = 'u32[]', space=smem, size = 0x4, offset = 0x4, fixed_abs, tag = 'smem constant byte address 0x4 - core index']
  #allocation1 [shape = 'u32[144,128]{1,0:T(1,128)}', space=vmem, size = 0x12000, scoped, tag = 'internal scratch']
  #allocation2 [shape = 'f32[8,4]{1,0:T(8,128)}', space=vmem, size = 0x1000, scoped, tag = 'scratch operand']
  %s0 = inlined_call_operand.hbm [shape: f32[2,4,256], index: 0, kind: input, shape index: {}]
  %s1 = inlined_call_operand.hbm [shape: f32[4,8], index: 1, kind: input, shape index: {}]
  %s2 = inlined_call_operand.vmem [shape: f32[1,8], index: 2, kind: input, shape index: {}]
  %s3 = inlined_call_operand.hbm [shape: f32[2,8], index: 3, kind: output, shape index: {}]
  %s4 = sld [smem:[#allocation0]]
  $region38: #{tpu_custom_call.1} parent=0
    _
  %s6 = ssub.s32 1, %s4
  %s7 = scalar_select 0, %s6, %s4
  $region1: #{tpu_custom_call.1} parent=0
    #allocation3 [shape = 'u8[32768]{0}', space=vmem, size = 0x8000, scoped, tag = 'input window, operand 0, single buffered']
    #allocation4 [shape = 's32[1]{0}', space=sflag, size = 0x4, scoped, tag = 'scoped memory for tpu_custom_call.1']
    #allocation5 [shape = 's32[1]{0}', space=sflag, size = 0x4, scoped, tag = 'scoped memory for tpu_custom_call.1']
    #allocation6 [shape = 'u8[2048]{0}', space=vmem, size = 0x800, scoped, tag = 'input window, operand 1, single buffered']
    #allocation7 [shape = 's32[1]{0}', space=sflag, size = 0x4, scoped, tag = 'scoped memory for tpu_custom_call.1']
    #allocation8 [shape = 'u8[4096]{0}', space=vmem, size = 0x1000, scoped, tag = 'output window, operand 0, single buffered']
    %8 = vsyncpa [#allocation4], 0
    %9 = vsyncpa [#allocation7], 0
    %10 = vsyncpa [#allocation5], 0
    // Predicated region
    $region2: #{tpu_custom_call.1} parent=1 // pred_check
      _
    $region3: #{tpu_custom_call.1} parent=1 // pred_check_branch
      %12 = sbr.rel (0) target = $region5
    $region4: #{tpu_custom_call.1} parent=1 // pred_region
      %s14 = ssub.s32 1024, 256
      %15 = vsyncadd [#allocation4], %s14
      %s16 = sshll.u32 [#allocation3], 4
      %s17 = int_to_ptr.vmem [resolvable:$true] %s16
      %22 = dma.hbm_to_vmem [thread:$0]  %s0, 256, %s17, [#allocation4], 128, 128, 8
    $region5: #{tpu_custom_call.1} parent=1 // pred_fallthru
      _
    // Predicated region
    $region6: #{tpu_custom_call.1} parent=1 // pred_check
      _
    $region7: #{tpu_custom_call.1} parent=1 // pred_check_branch
      %24 = sbr.rel (0) target = $region9
    $region8: #{tpu_custom_call.1} parent=1 // pred_region
      %s26 = ssub.s32 64, 64
      %27 = vsyncadd [#allocation7], %s26
      %s29 = sshll.u32 [#allocation6], 4
      %s30 = int_to_ptr.vmem [resolvable:$true] %s29
      %32 = dma.hbm_to_vmem [thread:$0]  %s1, 64, %s30, [#allocation7]
    $region9: #{tpu_custom_call.1} parent=1 // pred_fallthru
      _
    // Predicated region
    $region10: #{tpu_custom_call.1} parent=1 // pred_check
      _
    $region11: #{tpu_custom_call.1} parent=1 // pred_check_branch
      %34 = sbr.rel (0) target = $region13
    $region12: #{tpu_custom_call.1} parent=1 // pred_region
      _
    $region13: #{tpu_custom_call.1} parent=1 // pred_fallthru
      _
    // Predicated region
    $region14: #{tpu_custom_call.1} parent=1 // pred_check
      _
    $region15: #{tpu_custom_call.1} parent=1 // pred_check_branch
      %36 = sbr.rel (0) target = $region17
    $region16: #{tpu_custom_call.1} parent=1 // pred_region
      %37 = dma.done [#allocation4], 1024
    $region17: #{tpu_custom_call.1} parent=1 // pred_fallthru
      _
    // Predicated region
    $region18: #{tpu_custom_call.1} parent=1 // pred_check
      _
    $region19: #{tpu_custom_call.1} parent=1 // pred_check_branch
      %39 = sbr.rel (0) target = $region21
    $region20: #{tpu_custom_call.1} parent=1 // pred_region
      %40 = dma.done [#allocation7], 64
    $region21: #{tpu_custom_call.1} parent=1 // pred_fallthru
      _
    %p41 = scmp.eq.s32.totalorder 0, 0
    // Predicated region
    $region22: #{tpu_custom_call.1} parent=1 // pred_check
      %p42 = pneg %p41
    $region23: #{tpu_custom_call.1} parent=1 // pred_check_branch
      %44 = sbr.rel (%p42) target = $region25
    $region24: #{tpu_custom_call.1} parent=1 // pred_region
      %vm45 = vcmask 31744
      %46 = vst.msk [vmem:[#allocation2] sm:$0xff] %vm45, 0.0
    $region25: #{tpu_custom_call.1} parent=1 // pred_fallthru
      _
    %v47 = vld [vmem:[#allocation3] sm:$0xff]
    %v48 = vld [vmem:[#allocation3 + $0x8] sm:$0xff]
    %v49 = vld [vmem:[#allocation3 + $0x10] sm:$0xff]
    %v50 = vld [vmem:[#allocation3 + $0x18] sm:$0xff]
    %v51 = vld [vmem:[#allocation3 + $0x20] sm:$0xff]
    %v52 = vld [vmem:[#allocation3 + $0x28] sm:$0xff]
    %v53 = vld [vmem:[#allocation3 + $0x30] sm:$0xff]
    %v54 = vld [vmem:[#allocation3 + $0x38] sm:$0xff]
    %v55 = vld [vmem:[#allocation2] sm:$0xff]
    %v64 = vcombine.high %v47, %v47
    %v65 = vcombine.high %v48, %v48
    %v66 = vcombine.high %v49, %v49
    %v67 = vcombine.high %v50, %v50
    %v68 = vcombine.high %v51, %v51
    %v69 = vcombine.high %v52, %v52
    %v70 = vcombine.high %v53, %v53
    %v71 = vcombine.high %v54, %v54
    %vm80 = vcmask 1043456
    %v81 = vsel %vm80, %v47, 0.0
    %v82 = vsel %vm80, %v64, 0.0
    %v83 = vadd.f32 %v81, %v82
    %84 = vadd.xlane.f32.xlu0 %v83
    %v85 = vpop.xlane.xlu0 %84
    %v86 = vsel %vm80, %v48, 0.0
    %v87 = vsel %vm80, %v65, 0.0
    %v88 = vadd.f32 %v86, %v87
    %89 = vadd.xlane.f32.xlu0 %v88
    %v90 = vpop.xlane.xlu0 %89
    %v91 = vsel %vm80, %v49, 0.0
    %v92 = vsel %vm80, %v66, 0.0
    %v93 = vadd.f32 %v91, %v92
    %94 = vadd.xlane.f32.xlu0 %v93
    %v95 = vpop.xlane.xlu0 %94
    %v96 = vsel %vm80, %v50, 0.0
    %v97 = vsel %vm80, %v67, 0.0
    %v98 = vadd.f32 %v96, %v97
    %99 = vadd.xlane.f32.xlu0 %v98
    %v100 = vpop.xlane.xlu0 %99
    %v101 = vsel %vm80, %v51, 0.0
    %v102 = vsel %vm80, %v68, 0.0
    %v103 = vadd.f32 %v101, %v102
    %104 = vadd.xlane.f32.xlu0 %v103
    %v105 = vpop.xlane.xlu0 %104
    %v106 = vsel %vm80, %v52, 0.0
    %v107 = vsel %vm80, %v69, 0.0
    %v108 = vadd.f32 %v106, %v107
    %109 = vadd.xlane.f32.xlu0 %v108
    %v110 = vpop.xlane.xlu0 %109
    %v111 = vsel %vm80, %v53, 0.0
    %v112 = vsel %vm80, %v70, 0.0
    %v113 = vadd.f32 %v111, %v112
    %114 = vadd.xlane.f32.xlu0 %v113
    %v115 = vpop.xlane.xlu0 %114
    %v116 = vsel %vm80, %v54, 0.0
    %v117 = vsel %vm80, %v71, 0.0
    %v118 = vadd.f32 %v116, %v117
    %119 = vadd.xlane.f32.xlu0 %v118
    %v120 = vpop.xlane.xlu0 %119
    %v129 = vlaneseq
    %v130 = vand.u32 %v129, 127
    %v131 = vlaneseq
    %v132 = vshrl.u32 %v131, 7
    %v133 = vsub.s32 %v130, %v132
    %v134 = vrot.slane %v85, %v133
    %v135 = vlaneseq
    %v136 = vshrl.u32 %v135, 7
    %v137 = vsub.s32 %v130, %v136
    %v138 = vrot.slane %v90, %v137
    %v139 = vlaneseq
    %v140 = vshrl.u32 %v139, 7
    %v141 = vsub.s32 %v130, %v140
    %v142 = vrot.slane %v95, %v141
    %v143 = vlaneseq
    %v144 = vshrl.u32 %v143, 7
    %v145 = vsub.s32 %v130, %v144
    %v146 = vrot.slane %v100, %v145
    %v147 = vlaneseq
    %v148 = vshrl.u32 %v147, 7
    %v149 = vsub.s32 %v130, %v148
    %v150 = vrot.slane %v105, %v149
    %v151 = vlaneseq
    %v152 = vshrl.u32 %v151, 7
    %v153 = vsub.s32 %v130, %v152
    %v154 = vrot.slane %v110, %v153
    %v155 = vlaneseq
    %v156 = vshrl.u32 %v155, 7
    %v157 = vsub.s32 %v130, %v156
    %v158 = vrot.slane %v115, %v157
    %v159 = vlaneseq
    %v160 = vshrl.u32 %v159, 7
    %v161 = vsub.s32 %v130, %v160
    %v162 = vrot.slane %v120, %v161
    %vm163 = vcmask 1041409
    %v164 = vsel %vm163, %v138, %v134
    %vm165 = vcmask 1042434
    %v166 = vsel %vm165, %v142, %v164
    %vm167 = vcmask 1043459
    %v168 = vsel %vm167, %v146, %v166
    %vm169 = vcmask 1044484
    %v170 = vsel %vm169, %v150, %v168
    %vm171 = vcmask 1045509
    %v172 = vsel %vm171, %v154, %v170
    %vm173 = vcmask 1046534
    %v174 = vsel %vm173, %v158, %v172
    %vm175 = vcmask 1047559
    %v176 = vsel %vm175, %v162, %v174
    %v178 = vadd.f32 %v55, %v176
    %vm179 = vcmask 31744
    %180 = vst.msk [vmem:[#allocation2] sm:$0xff] %vm179, %v178
    // Predicated region
    $region26: #{tpu_custom_call.1} parent=1 // pred_check
      %p181 = pneg %p41
    $region27: #{tpu_custom_call.1} parent=1 // pred_check_branch
      %183 = sbr.rel (%p181) target = $region29
    $region28: #{tpu_custom_call.1} parent=1 // pred_region
      %v184 = vld [vmem:[#allocation2] sm:$0xff]
      %v185 = vld [vmem:[#allocation6] sm:$0xf]
      %v186 = vld [vmem:[%s2] sm:$0x1]
      %v188 = vlaneseq
      %v189 = vshrl.u32 %v188, 7
      %v190 = vsub.s32 0, %v189
      %v191 = vrot.slane %v186, %v190
      %v194 = vsel %vm179, %v184, 0
      %v197 = vsel %vm80, %v185, 0
      %199 = vmatprep.subr.mxu0 0.0
      %200 = vmatpush1.msra.mxu0 %v197
      %201 = vmatprep.subr.mxu0 0.0
      %202 = vmatpush1.msra.mxu0 0.0
      %203 = vmatprep.subr.mxu0 0.0
      %204 = vmatpush1.msra.mxu0 0.0
      %205 = vmatprep.subr.mxu0 0.0
      %206 = vmatpush1.msra.mxu0 0.0
      %207 = vmatprep.subr.mxu0 0.0
      %208 = vmatpush1.msra.mxu0 0.0
      %209 = vmatprep.subr.mxu0 0.0
      %210 = vmatpush1.msra.mxu0 0.0
      %211 = vmatprep.subr.mxu0 0.0
      %212 = vmatpush1.msra.mxu0 0.0
      %213 = vmatprep.subr.mxu0 0.0
      %214 = vmatpush1.msra.mxu0 0.0
      %215 = vmatprep.subr.mxu0 0.0
      %216 = vmatpush1.msra.mxu0 0.0
      %217 = vmatprep.subr.mxu0 0.0
      %218 = vmatpush1.msra.mxu0 0.0
      %219 = vmatprep.subr.mxu0 0.0
      %220 = vmatpush1.msra.mxu0 0.0
      %221 = vmatprep.subr.mxu0 0.0
      %222 = vmatpush1.msra.mxu0 0.0
      %223 = vmatprep.subr.mxu0 0.0
      %224 = vmatpush1.msra.mxu0 0.0
      %225 = vmatprep.subr.mxu0 0.0
      %226 = vmatpush1.msra.mxu0 0.0
      %227 = vmatprep.subr.mxu0 0.0
      %228 = vmatpush1.msra.mxu0 0.0
      %229 = vmatprep.subr.mxu0 0.0
      %230 = vmatpush1.msra.mxu0 0.0
      %231 = vmatprep.subr.mxu0 0.0
      %232 = vmatpush1.msra.mxu0 0.0
      %233 = vmatprep.subr.mxu0 0.0
      %234 = vmatpush1.msra.mxu0 0.0
      %235 = vmatprep.subr.mxu0 0.0
      %236 = vmatpush1.msra.mxu0 0.0
      %237 = vmatprep.subr.mxu0 0.0
      %238 = vmatpush1.msra.mxu0 0.0
      %239 = vmatprep.subr.mxu0 0.0
      %240 = vmatpush1.msra.mxu0 0.0
      %241 = vmatprep.subr.mxu0 0.0
      %242 = vmatpush1.msra.mxu0 0.0
      %243 = vmatprep.subr.mxu0 0.0
      %244 = vmatpush1.msra.mxu0 0.0
      %245 = vmatprep.subr.mxu0 0.0
      %246 = vmatpush1.msra.mxu0 0.0
      %247 = vmatprep.subr.mxu0 0.0
      %248 = vmatpush1.msra.mxu0 0.0
      %249 = vmatprep.subr.mxu0 0.0
      %250 = vmatpush1.msra.mxu0 0.0
      %251 = vmatprep.subr.mxu0 0.0
      %252 = vmatpush1.msra.mxu0 0.0
      %253 = vmatprep.subr.mxu0 0.0
      %254 = vmatpush1.msra.mxu0 0.0
      %255 = vmatprep.subr.mxu0 0.0
      %256 = vmatpush1.msra.mxu0 0.0
      %257 = vmatprep.subr.mxu0 0.0
      %258 = vmatpush1.msra.mxu0 0.0
      %259 = vmatprep.subr.mxu0 0.0
      %260 = vmatpush1.msra.mxu0 0.0
      %261 = vmatprep.subr.mxu0 0.0
      %262 = vmatpush1.msra.mxu0 0.0
      %263 = vmatprep.mubr.f32.mxu0 0.0
      %264 = vmatmul.mubr.f32.gmra.mrb[0].mxu0 %v194
      %v265 = vpop.f32.mrb[0].mxu0
      %v266 = vadd.f32 %v191, %v265
      %v267 = vpop.f32.mrb[0].mxu0
      %268 = vdwg.mxu0
      %vm269 = vcmask 64512
      %270 = vst.msk [vmem:[#allocation8] sm:$0xff] %vm269, %v266
    $region29: #{tpu_custom_call.1} parent=1 // pred_fallthru
      _
    // Predicated region
    $region30: #{tpu_custom_call.1} parent=1 // pred_check
      _
    $region31: #{tpu_custom_call.1} parent=1 // pred_check_branch
      %272 = sbr.rel (0) target = $region33
    $region32: #{tpu_custom_call.1} parent=1 // pred_region
      %s274 = ssub.s32 128, 32
      %275 = vsyncadd [#allocation5], %s274
      %s276 = sshll.u32 [#allocation8], 4
      %s277 = int_to_ptr.vmem [resolvable:$true] %s276
      %282 = dma.vmem_to_hbm [thread:$0]  %s277, 32, %s3, [#allocation5], 32, 32, 2
    $region33: #{tpu_custom_call.1} parent=1 // pred_fallthru
      _
    // Predicated region
    $region34: #{tpu_custom_call.1} parent=1 // pred_check
      _
    $region35: #{tpu_custom_call.1} parent=1 // pred_check_branch
      %284 = sbr.rel (0) target = $region37
    $region36: #{tpu_custom_call.1} parent=1 // pred_region
      %285 = dma.done [#allocation5], 128
    $region37: #{tpu_custom_call.1} parent=1 // pred_fallthru
      _
    %286 = vsyncpa [#allocation4], 1
    %287 = vsyncpa [#allocation7], 1
    %288 = vsyncpa [#allocation5], 1

</llo_original>
